<compile_context>
chip_gen: v7x
topology: tpu7x:2x2x1
jax: 0.10.0
libtpu: 0.0.40
codegen_flags: <defaults>
</compile_context>

<pallas_src>
import functools

import jax
import jax.numpy as jnp
from jax.experimental import pallas as pl
from jax.experimental.pallas import tpu as pltpu


def _round_up(x, m):
    return ((x + m - 1) // m) * m


def graphconv_kernel(adj_ref, hsrc_ref, hdst_ref, w1_ref, w2_ref, b_ref,
                     out_ref, acc_ah, *, deg_col):
    """Grid = (dst tiles, src reduction tiles); axis 1 is the reduction."""
    k = pl.program_id(1)

    @pl.when(k == 0)
    def _init():
        acc_ah[...] = jnp.zeros_like(acc_ah)

    # int8 {0,1} adjacency -> bf16 (exact); bf16 x bf16 MXU matmul, f32 accum.
    # Column `deg_col` of h_src is all-ones, so the same matmul also
    # accumulates the in-degree into acc_ah[:, deg_col] (free MXU work).
    a = adj_ref[...].astype(jnp.bfloat16)
    acc_ah[...] += jnp.dot(a, hsrc_ref[...], preferred_element_type=jnp.float32)

    @pl.when(k == pl.num_programs(1) - 1)
    def _finalize():
        acc = acc_ah[...]
        deg = acc[:, deg_col:deg_col + 1]
        inv_deg = jnp.where(deg > 0.0, pl.reciprocal(deg, approx=True), 0.0)
        # Mean over in-neighbors.  W2 rows >= in_feats are zero, so the degree
        # column riding in the K-padding never reaches the output.
        neigh = (acc * inv_deg).astype(jnp.bfloat16)
        z = (jnp.dot(hdst_ref[...], w1_ref[...], preferred_element_type=jnp.float32)
             + jnp.dot(neigh, w2_ref[...], preferred_element_type=jnp.float32)
             + b_ref[...])
        out_ref[...] = jnp.maximum(z, 0.0).astype(out_ref.dtype)


def _pick_defaults():
    """Generation-aware tile / scoped-VMEM defaults."""
    try:
        kind = jax.devices()[0].device_kind.lower()
    except Exception:
        kind = ""
    if "v7" in kind:
        # 64 MiB VMEM per TensorCore; the parallel dst axis also shards across 2 TCs.
        return 256, 512, 40 * 1024 * 1024
    # v5e / v6e: 128 MiB VMEM -> bigger dst tile cuts the re-streamed h_src.
    return 512, 512, 96 * 1024 * 1024


def my_graph_conv(adj, h, num_dst, W, b, *, tm=None, ts=None, vmem_cap=None):
    """adj: [num_dst, num_src] in {0,1}; h: [num_src, in_feats];
       W: [out_feats, 2*in_feats]; b: [out_feats]."""
    num_src, in_feats = h.shape
    out_feats = W.shape[0]
    assert adj.shape == (num_dst, num_src)
    assert W.shape == (out_feats, 2 * in_feats)

    d_tm, d_ts, d_cap = _pick_defaults()
    tm = d_tm if tm is None else tm
    ts = d_ts if ts is None else ts
    vmem_cap = d_cap if vmem_cap is None else vmem_cap

    # Lane-dense padded dims.  K_pad reserves >= 1 padding column so the degree
    # can be fused into the A@h matmul as an all-ones feature column.
    K_pad = _round_up(in_feats + 1, 128)
    N_pad = _round_up(out_feats, 128)
    deg_col = in_feats

    # Tile sizes: dst rows 32-aligned (int8 native sublane tile), src cols
    # 128-aligned, clamped for tiny problems.
    TM = min(tm, _round_up(num_dst, 32))
    TS = min(ts, _round_up(num_src, 128))
    D_pad = _round_up(num_dst, TM)
    S_pad = _round_up(num_src, TS)
    R_pad = max(S_pad, D_pad)          # padded h rows serve both src & dst reads

    # int8 adjacency: {0,1} is exact and shrinks the dominant HBM stream.
    # TODO(synk): in production accept a pre-padded/pre-cast int8 adjacency to
    # avoid re-materializing the padded copy in HBM on every call.
    adj_p = jnp.zeros((D_pad, S_pad), jnp.int8).at[:num_dst, :num_src].set(
        adj.astype(jnp.int8))

    # bf16 features (the reduction still accumulates in f32).  The first
    # K-padding column is all-ones -> its accumulator column holds the degree.
    h_p = jnp.zeros((R_pad, K_pad), jnp.bfloat16)
    h_p = h_p.at[:num_src, :in_feats].set(h.astype(jnp.bfloat16))
    h_p = h_p.at[:, deg_col].set(1.0)

    # Fold concat([h_dst, h_neigh]) @ W.T into h_dst @ W1 + h_neigh @ W2.
    # Padded rows/cols of W1/W2 are zero, so neither the ones column nor the
    # lane padding leaks into the output.
    W1 = jnp.zeros((K_pad, N_pad), jnp.bfloat16).at[:in_feats, :out_feats].set(
        W[:, :in_feats].T.astype(jnp.bfloat16))
    W2 = jnp.zeros((K_pad, N_pad), jnp.bfloat16).at[:in_feats, :out_feats].set(
        W[:, in_feats:].T.astype(jnp.bfloat16))
    b_p = jnp.zeros((1, N_pad), jnp.float32).at[0, :out_feats].set(
        b.astype(jnp.float32))

    grid = (D_pad // TM, S_pad // TS)

    # Scoped-VMEM budget from the actual (double-buffered) tile footprint,
    # capped per generation (<= 40 MiB on v7x's 64 MiB VMEM).
    bytes_per_step = (
        2 * TM * TS * 1                 # adjacency tile (int8), double buffered
        + 2 * TS * K_pad * 2            # h_src tile (bf16)
        + 2 * TM * K_pad * 2            # h_dst tile (bf16)
        + 2 * 2 * K_pad * N_pad * 2     # W1, W2 (bf16)
        + 2 * 1 * N_pad * 4             # bias (f32)
        + 2 * TM * N_pad * 4            # output tile (f32)
        + TM * K_pad * 4                # accumulator scratch (f32)
    )
    vmem_limit = int(min(vmem_cap,
                         max(24 * 1024 * 1024, 2 * bytes_per_step + (8 << 20))))

    kernel = functools.partial(graphconv_kernel, deg_col=deg_col)

    # TODO(synk): single-buffer the reduction-invariant W1/W2/bias (e.g. via
    # pipeline_mode=pl.Buffered(1) or a one-time scratch preload) to free VMEM
    # for deeper adjacency buffering; and for realistically sparse graphs
    # replace the dense A@h with a CSR neighbor gather (PrefetchScalarGridSpec
    # + manual make_async_copy) instead of a dense adjacency matmul.
    out = pl.pallas_call(
        kernel,
        out_shape=jax.ShapeDtypeStruct((D_pad, N_pad), jnp.float32),
        grid=grid,
        in_specs=[
            pl.BlockSpec((TM, TS), lambda i, k: (i, k)),          # adjacency tile (int8)
            pl.BlockSpec((TS, K_pad), lambda i, k: (k, 0)),       # src feature tile (bf16)
            pl.BlockSpec((TM, K_pad), lambda i, k: (i, 0)),       # dst features (same buffer)
            pl.BlockSpec((K_pad, N_pad), lambda i, k: (0, 0)),    # W1
            pl.BlockSpec((K_pad, N_pad), lambda i, k: (0, 0)),    # W2
            pl.BlockSpec((1, N_pad), lambda i, k: (0, 0)),        # bias
        ],
        out_specs=pl.BlockSpec((TM, N_pad), lambda i, k: (i, 0)),
        scratch_shapes=[
            pltpu.VMEM((TM, K_pad), jnp.float32),   # f32 accumulator for A@h (+ degree column)
        ],
        compiler_params=pltpu.CompilerParams(
            dimension_semantics=("parallel", "arbitrary"),
            vmem_limit_bytes=vmem_limit),
    )(adj_p, h_p, h_p, W1, W2, b_p)

    return out[:num_dst, :out_feats]


def reference(adj, h, num_dst, W, b):
    h = h.astype(jnp.float32)
    h_dst = h[:num_dst]
    deg = jnp.sum(adj, axis=1, keepdims=True)
    h_neigh = jnp.where(deg > 0, (adj @ h) / jnp.maximum(deg, 1.0), 0.0)
    cat = jnp.concatenate([h_dst, h_neigh], axis=1)
    return jax.nn.relu(cat @ W.T + b)


if __name__ == "__main__":
    key = jax.random.PRNGKey(0)
    num_src, num_dst = 16, 8
    in_feats, out_feats = 32, 16

    k_h, k_w, k_b = jax.random.split(key, 3)

    # Node features.
    h = jax.random.normal(k_h, (num_src, in_feats), dtype=jnp.float32)

    # Deterministic block adjacency: dst i has in-neighbors {i, i+1, i+2, i+3} mod num_src.
    dst_idx = jnp.arange(num_dst)[:, None]                     # [num_dst, 1]
    src_idx = jnp.arange(num_src)[None, :]                     # [1, num_src]
    neigh = (dst_idx + jnp.arange(4)[None, :]) % num_src       # [num_dst, 4]
    adj = (src_idx[:, None, :] == neigh[:, :, None]).any(axis=1).astype(jnp.float32)
    adj = adj.reshape(num_dst, num_src)

    # nn.Linear(in_feats*2, out_feats) parameters (deterministic uniform init).
    fan_in = 2 * in_feats
    bound = 1.0 / jnp.sqrt(fan_in)
    W = jax.random.uniform(k_w, (out_feats, 2 * in_feats),
                           minval=-bound, maxval=bound, dtype=jnp.float32)
    b = jax.random.uniform(k_b, (out_feats,),
                           minval=-bound, maxval=bound, dtype=jnp.float32)

    out = my_graph_conv(adj, h, num_dst, W, b)
    out = jax.block_until_ready(out)

    ref = reference(adj, h, num_dst, W, b)
    assert out.shape == (num_dst, out_feats)
    # bf16 MXU inputs + approx reciprocal -> looser tolerance than the f32 reference.
    assert jnp.allclose(out, ref, atol=3e-2, rtol=3e-2), "mismatch vs reference"

    print("KERNEL_OK")
</pallas_src>

<mosaic_0001>
module attributes {stable_mosaic.version = 11 : i64} {
  func.func @graphconv_kernel(%arg0: i32, %arg1: i32, %arg2: memref<32x128xi8, #tpu.memory_space<vmem>>, %arg3: memref<128x128xbf16, #tpu.memory_space<vmem>>, %arg4: memref<32x128xbf16, #tpu.memory_space<vmem>>, %arg5: memref<128x128xbf16, #tpu.memory_space<vmem>>, %arg6: memref<128x128xbf16, #tpu.memory_space<vmem>>, %arg7: memref<1x128xf32, #tpu.memory_space<vmem>>, %arg8: memref<32x128xf32, #tpu.memory_space<vmem>>, %arg9: memref<32x128xf32, #tpu.memory_space<vmem>>) attributes {dimension_semantics = [#tpu.dimension_semantics<parallel>, #tpu.dimension_semantics<arbitrary>], iteration_bounds = array<i64: 1, 1>, scalar_prefetch = 0 : i64, scratch_operands = 1 : i64, tpu.core_type = #tpu.core_type<tc>, window_params = [{transform_indices = @transform_0, window_bounds = array<i64: 32, 128>}, {transform_indices = @transform_1, window_bounds = array<i64: 128, 128>}, {transform_indices = @transform_2, window_bounds = array<i64: 32, 128>}, {pipeline_mode = #tpu.pipeline_mode<synchronous>, transform_indices = @transform_3, window_bounds = array<i64: 128, 128>}, {pipeline_mode = #tpu.pipeline_mode<synchronous>, transform_indices = @transform_4, window_bounds = array<i64: 128, 128>}, {pipeline_mode = #tpu.pipeline_mode<synchronous>, transform_indices = @transform_5, window_bounds = array<i64: 1, 128>}, {transform_indices = @transform_6, window_bounds = array<i64: 32, 128>}]} {
    %c0_i32 = arith.constant 0 : i32
    %0 = arith.cmpi eq, %arg1, %c0_i32 : i32
    %1 = arith.extui %0 : i1 to i32
    %c0_i32_0 = arith.constant 0 : i32
    %2 = arith.cmpi ne, %1, %c0_i32_0 : i32
    scf.if %2 {
      %cst_10 = arith.constant 0.000000e+00 : f32
      %13 = vector.broadcast %cst_10 : f32 to vector<32x128xf32>
      %c0_11 = arith.constant 0 : index
      %c0_12 = arith.constant 0 : index
      %14 = vector.load %arg9[%c0_11, %c0_12] : memref<32x128xf32, #tpu.memory_space<vmem>>, vector<32x128xf32>
      tpu.vector_store %arg9[%c0_11, %c0_12], %13 {strides = array<i32>} : memref<32x128xf32, #tpu.memory_space<vmem>>, vector<32x128xf32>,
    } else {
    }
    %c0 = arith.constant 0 : index
    %c0_1 = arith.constant 0 : index
    %3 = vector.load %arg2[%c0, %c0_1] : memref<32x128xi8, #tpu.memory_space<vmem>>, vector<32x128xi8>
    %4 = arith.sitofp %3 : vector<32x128xi8> to vector<32x128xbf16>
    %c0_2 = arith.constant 0 : index
    %c0_3 = arith.constant 0 : index
    %5 = vector.load %arg9[%c0_2, %c0_3] : memref<32x128xf32, #tpu.memory_space<vmem>>, vector<32x128xf32>
    %c0_4 = arith.constant 0 : index
    %c0_5 = arith.constant 0 : index
    %6 = vector.load %arg3[%c0_4, %c0_5] : memref<128x128xbf16, #tpu.memory_space<vmem>>, vector<128x128xbf16>
    %cst = arith.constant dense<0.000000e+00> : vector<32x128xf32>
    %7 = tpu.matmul %4, %6, %cst {dimension_numbers = #tpu.dot_dimension_numbers<[1], [0], [0], [1], [0, 0, 1, 1], [], []>} : vector<32x128xbf16>, vector<128x128xbf16>, vector<32x128xf32> -> vector<32x128xf32>
    %8 = arith.addf %5, %7 : vector<32x128xf32>
    %c0_6 = arith.constant 0 : index
    %c0_7 = arith.constant 0 : index
    %9 = vector.load %arg9[%c0_6, %c0_7] : memref<32x128xf32, #tpu.memory_space<vmem>>, vector<32x128xf32>
    tpu.vector_store %arg9[%c0_6, %c0_7], %8 {strides = array<i32>} : memref<32x128xf32, #tpu.memory_space<vmem>>, vector<32x128xf32>,
    %c0_i32_8 = arith.constant 0 : i32
    %10 = arith.cmpi eq, %arg1, %c0_i32_8 : i32
    %11 = arith.extui %10 : i1 to i32
    %c0_i32_9 = arith.constant 0 : i32
    %12 = arith.cmpi ne, %11, %c0_i32_9 : i32
    scf.if %12 {
      %c0_10 = arith.constant 0 : index
      %c0_11 = arith.constant 0 : index
      %13 = vector.load %arg9[%c0_10, %c0_11] : memref<32x128xf32, #tpu.memory_space<vmem>>, vector<32x128xf32>
      %14 = vector.extract_strided_slice %13 {offsets = [0, 32], sizes = [32, 1], strides = [1, 1]} : vector<32x128xf32> to vector<32x1xf32>
      %cst_12 = arith.constant 0.000000e+00 : f32
      %15 = vector.broadcast %cst_12 : f32 to vector<32x1xf32>
      %16 = arith.cmpf ogt, %14, %15 : vector<32x1xf32>
      %17 = tpu.reciprocal %14 {approx = true} : vector<32x1xf32> -> vector<32x1xf32>
      %cst_13 = arith.constant 0.000000e+00 : f32
      %18 = vector.broadcast %cst_13 : f32 to vector<32x1xf32>
      %19 = arith.select %16, %17, %18 : vector<32x1xi1>, vector<32x1xf32>
      %20 = vector.broadcast %19 : vector<32x1xf32> to vector<32x128xf32>
      %21 = arith.mulf %13, %20 : vector<32x128xf32>
      %22 = arith.truncf %21 : vector<32x128xf32> to vector<32x128xbf16>
      %c0_14 = arith.constant 0 : index
      %c0_15 = arith.constant 0 : index
      %23 = vector.load %arg4[%c0_14, %c0_15] : memref<32x128xbf16, #tpu.memory_space<vmem>>, vector<32x128xbf16>
      %c0_16 = arith.constant 0 : index
      %c0_17 = arith.constant 0 : index
      %24 = vector.load %arg5[%c0_16, %c0_17] : memref<128x128xbf16, #tpu.memory_space<vmem>>, vector<128x128xbf16>
      %cst_18 = arith.constant dense<0.000000e+00> : vector<32x128xf32>
      %25 = tpu.matmul %23, %24, %cst_18 {dimension_numbers = #tpu.dot_dimension_numbers<[1], [0], [0], [1], [0, 0, 1, 1], [], []>} : vector<32x128xbf16>, vector<128x128xbf16>, vector<32x128xf32> -> vector<32x128xf32>
      %c0_19 = arith.constant 0 : index
      %c0_20 = arith.constant 0 : index
      %26 = vector.load %arg6[%c0_19, %c0_20] : memref<128x128xbf16, #tpu.memory_space<vmem>>, vector<128x128xbf16>
      %cst_21 = arith.constant dense<0.000000e+00> : vector<32x128xf32>
      %27 = tpu.matmul %22, %26, %cst_21 {dimension_numbers = #tpu.dot_dimension_numbers<[1], [0], [0], [1], [0, 0, 1, 1], [], []>} : vector<32x128xbf16>, vector<128x128xbf16>, vector<32x128xf32> -> vector<32x128xf32>
      %28 = arith.addf %25, %27 : vector<32x128xf32>
      %c0_22 = arith.constant 0 : index
      %c0_23 = arith.constant 0 : index
      %29 = vector.load %arg7[%c0_22, %c0_23] : memref<1x128xf32, #tpu.memory_space<vmem>>, vector<1x128xf32>
      %30 = vector.broadcast %29 : vector<1x128xf32> to vector<32x128xf32>
      %31 = arith.addf %28, %30 : vector<32x128xf32>
      %cst_24 = arith.constant 0.000000e+00 : f32
      %32 = vector.broadcast %cst_24 : f32 to vector<32x128xf32>
      %33 = arith.maximumf %31, %32 : vector<32x128xf32>
      %c0_25 = arith.constant 0 : index
      %c0_26 = arith.constant 0 : index
      %34 = vector.load %arg8[%c0_25, %c0_26] : memref<32x128xf32, #tpu.memory_space<vmem>>, vector<32x128xf32>
      tpu.vector_store %arg8[%c0_25, %c0_26], %33 {strides = array<i32>} : memref<32x128xf32, #tpu.memory_space<vmem>>, vector<32x128xf32>,
    } else {
    }
    return
  }
  func.func @transform_0(%arg0: i32, %arg1: i32) -> (i32, i32) {
    %c0_i32 = arith.constant 0 : i32
    return %arg0, %arg1 : i32, i32
  }
  func.func @transform_1(%arg0: i32, %arg1: i32) -> (i32, i32) {
    %c0_i32 = arith.constant 0 : i32
    %c0_i32_0 = arith.constant 0 : i32
    return %arg1, %c0_i32 : i32, i32
  }
  func.func @transform_2(%arg0: i32, %arg1: i32) -> (i32, i32) {
    %c0_i32 = arith.constant 0 : i32
    %c0_i32_0 = arith.constant 0 : i32
    return %arg0, %c0_i32 : i32, i32
  }
  func.func @transform_3(%arg0: i32, %arg1: i32) -> (i32, i32) {
    %c0_i32 = arith.constant 0 : i32
    %c0_i32_0 = arith.constant 0 : i32
    %c0_i32_1 = arith.constant 0 : i32
    return %c0_i32, %c0_i32_0 : i32, i32
  }
  func.func @transform_4(%arg0: i32, %arg1: i32) -> (i32, i32) {
    %c0_i32 = arith.constant 0 : i32
    %c0_i32_0 = arith.constant 0 : i32
    %c0_i32_1 = arith.constant 0 : i32
    return %c0_i32, %c0_i32_0 : i32, i32
  }
  func.func @transform_5(%arg0: i32, %arg1: i32) -> (i32, i32) {
    %c0_i32 = arith.constant 0 : i32
    %c0_i32_0 = arith.constant 0 : i32
    %c0_i32_1 = arith.constant 0 : i32
    return %c0_i32, %c0_i32_0 : i32, i32
  }
  func.func @transform_6(%arg0: i32, %arg1: i32) -> (i32, i32) {
    %c0_i32 = arith.constant 0 : i32
    %c0_i32_0 = arith.constant 0 : i32
    return %arg0, %c0_i32 : i32, i32
  }
}

</mosaic_0001>

<llo_original>
// kernel: tpu_custom_call.1
$region0: #{tpu_custom_call.1}
  #allocation0 [shape = 'u32[]', space=smem, size = 0x4, offset = 0x4, fixed_abs, tag = 'smem constant byte address 0x4 - core index']
  #allocation1 [shape = 'u32[144,128]{1,0:T(1,128)}', space=vmem, size = 0x12000, scoped, tag = 'internal scratch']
  #allocation2 [shape = 'f32[32,128]{1,0:T(8,128)}', space=vmem, size = 0x4000, scoped, tag = 'scratch operand']
  %s0 = inlined_call_operand.hbm [shape: s8[32,128], index: 0, kind: input, shape index: {}]
  %s1 = inlined_call_operand.hbm [shape: bf16[128,128], index: 1, kind: input, shape index: {}]
  %s2 = inlined_call_operand.hbm [shape: bf16[128,128], index: 2, kind: input, shape index: {}]
  %s3 = inlined_call_operand.hbm [shape: bf16[128,128], index: 3, kind: input, shape index: {}]
  %s4 = inlined_call_operand.hbm [shape: bf16[128,128], index: 4, kind: input, shape index: {}]
  %s5 = inlined_call_operand.vmem [shape: f32[1,128], index: 5, kind: input, shape index: {}]
  %s6 = inlined_call_operand.hbm [shape: f32[32,128], index: 6, kind: output, shape index: {}]
  %s7 = sld [smem:[#allocation0]]
  $region62: #{tpu_custom_call.1} parent=0
    _
  %s9 = ssub.s32 1, %s7
  %s10 = scalar_select 0, %s9, %s7
  $region1: #{tpu_custom_call.1} parent=0
    #allocation3 [shape = 'u8[4096]{0}', space=vmem, size = 0x1000, scoped, tag = 'input window, operand 0, single buffered']
    #allocation4 [shape = 's32[1]{0}', space=sflag, size = 0x4, scoped, tag = 'scoped memory for tpu_custom_call.1']
    #allocation5 [shape = 's32[1]{0}', space=sflag, size = 0x4, scoped, tag = 'scoped memory for tpu_custom_call.1']
    #allocation6 [shape = 'u8[32768]{0}', space=vmem, size = 0x8000, scoped, tag = 'input window, operand 1, single buffered']
    #allocation7 [shape = 's32[1]{0}', space=sflag, size = 0x4, scoped, tag = 'scoped memory for tpu_custom_call.1']
    #allocation8 [shape = 'u8[8192]{0}', space=vmem, size = 0x2000, scoped, tag = 'input window, operand 2, single buffered']
    #allocation9 [shape = 'u8[32768]{0}', space=vmem, size = 0x8000, scoped, tag = 'input window, operand 3, single buffered']
    #allocation10 [shape = 's32[1]{0}', space=sflag, size = 0x4, scoped, tag = 'scoped memory for tpu_custom_call.1']
    #allocation11 [shape = 'u8[32768]{0}', space=vmem, size = 0x8000, scoped, tag = 'input window, operand 4, single buffered']
    #allocation12 [shape = 'u8[16384]{0}', space=vmem, size = 0x4000, scoped, tag = 'output window, operand 0, single buffered']
    %11 = vsyncpa [#allocation4], 0
    %12 = vsyncpa [#allocation7], 0
    %13 = vsyncpa [#allocation10], 0
    %14 = vsyncpa [#allocation5], 0
    // Predicated region
    $region2: #{tpu_custom_call.1} parent=1 // pred_check
      _
    $region3: #{tpu_custom_call.1} parent=1 // pred_check_branch
      %16 = sbr.rel (0) target = $region5
    $region4: #{tpu_custom_call.1} parent=1 // pred_region
      %s18 = ssub.s32 128, 128
      %19 = vsyncadd [#allocation4], %s18
      %s21 = sshll.u32 [#allocation3], 4
      %s22 = int_to_ptr.vmem [resolvable:$true] %s21
      %24 = dma.hbm_to_vmem [thread:$0]  %s0, 128, %s22, [#allocation4]
    $region5: #{tpu_custom_call.1} parent=1 // pred_fallthru
      _
    // Predicated region
    $region6: #{tpu_custom_call.1} parent=1 // pred_check
      _
    $region7: #{tpu_custom_call.1} parent=1 // pred_check_branch
      %26 = sbr.rel (0) target = $region9
    $region8: #{tpu_custom_call.1} parent=1 // pred_region
      %s28 = ssub.s32 1024, 1024
      %29 = vsyncadd [#allocation7], %s28
      %s30 = sshll.u32 [#allocation6], 4
      %s31 = int_to_ptr.vmem [resolvable:$true] %s30
      %36 = dma.hbm_to_vmem [thread:$0]  %s1, 1024, %s31, [#allocation7], 64, 64, 4
    $region9: #{tpu_custom_call.1} parent=1 // pred_fallthru
      _
    // Predicated region
    $region10: #{tpu_custom_call.1} parent=1 // pred_check
      _
    $region11: #{tpu_custom_call.1} parent=1 // pred_check_branch
      %38 = sbr.rel (0) target = $region13
    $region12: #{tpu_custom_call.1} parent=1 // pred_region
      %s40 = ssub.s32 256, 256
      %41 = vsyncadd [#allocation7], %s40
      %s42 = sshll.u32 [#allocation8], 4
      %s43 = int_to_ptr.vmem [resolvable:$true] %s42
      %48 = dma.hbm_to_vmem [thread:$0]  %s2, 256, %s43, [#allocation7], 64, 64, 4
    $region13: #{tpu_custom_call.1} parent=1 // pred_fallthru
      _
    // Predicated region
    $region14: #{tpu_custom_call.1} parent=1 // pred_check
      _
    $region15: #{tpu_custom_call.1} parent=1 // pred_check_branch
      %50 = sbr.rel (0) target = $region17
    $region16: #{tpu_custom_call.1} parent=1 // pred_region
      %s52 = ssub.s32 1024, 1024
      %53 = vsyncadd [#allocation10], %s52
      %s54 = sshll.u32 [#allocation9], 4
      %s55 = int_to_ptr.vmem [resolvable:$true] %s54
      %60 = dma.hbm_to_vmem [thread:$0]  %s3, 1024, %s55, [#allocation10], 64, 64, 4
    $region17: #{tpu_custom_call.1} parent=1 // pred_fallthru
      _
    // Predicated region
    $region18: #{tpu_custom_call.1} parent=1 // pred_check
      _
    $region19: #{tpu_custom_call.1} parent=1 // pred_check_branch
      %62 = sbr.rel (0) target = $region21
    $region20: #{tpu_custom_call.1} parent=1 // pred_region
      %s64 = ssub.s32 1024, 1024
      %65 = vsyncadd [#allocation10], %s64
      %s66 = sshll.u32 [#allocation11], 4
      %s67 = int_to_ptr.vmem [resolvable:$true] %s66
      %72 = dma.hbm_to_vmem [thread:$0]  %s4, 1024, %s67, [#allocation10], 64, 64, 4
    $region21: #{tpu_custom_call.1} parent=1 // pred_fallthru
      _
    // Predicated region
    $region22: #{tpu_custom_call.1} parent=1 // pred_check
      _
    $region23: #{tpu_custom_call.1} parent=1 // pred_check_branch
      %74 = sbr.rel (0) target = $region25
    $region24: #{tpu_custom_call.1} parent=1 // pred_region
      _
    $region25: #{tpu_custom_call.1} parent=1 // pred_fallthru
      _
    // Predicated region
    $region26: #{tpu_custom_call.1} parent=1 // pred_check
      _
    $region27: #{tpu_custom_call.1} parent=1 // pred_check_branch
      %76 = sbr.rel (0) target = $region29
    $region28: #{tpu_custom_call.1} parent=1 // pred_region
      %77 = dma.done [#allocation4], 128
    $region29: #{tpu_custom_call.1} parent=1 // pred_fallthru
      _
    // Predicated region
    $region30: #{tpu_custom_call.1} parent=1 // pred_check
      _
    $region31: #{tpu_custom_call.1} parent=1 // pred_check_branch
      %79 = sbr.rel (0) target = $region33
    $region32: #{tpu_custom_call.1} parent=1 // pred_region
      %80 = dma.done [#allocation7], 1024
    $region33: #{tpu_custom_call.1} parent=1 // pred_fallthru
      _
    // Predicated region
    $region34: #{tpu_custom_call.1} parent=1 // pred_check
      _
    $region35: #{tpu_custom_call.1} parent=1 // pred_check_branch
      %82 = sbr.rel (0) target = $region37
    $region36: #{tpu_custom_call.1} parent=1 // pred_region
      %83 = dma.done [#allocation7], 256
    $region37: #{tpu_custom_call.1} parent=1 // pred_fallthru
      _
    // Predicated region
    $region38: #{tpu_custom_call.1} parent=1 // pred_check
      _
    $region39: #{tpu_custom_call.1} parent=1 // pred_check_branch
      %85 = sbr.rel (0) target = $region41
    $region40: #{tpu_custom_call.1} parent=1 // pred_region
      %86 = dma.done [#allocation10], 1024
    $region41: #{tpu_custom_call.1} parent=1 // pred_fallthru
      _
    // Predicated region
    $region42: #{tpu_custom_call.1} parent=1 // pred_check
      _
    $region43: #{tpu_custom_call.1} parent=1 // pred_check_branch
      %88 = sbr.rel (0) target = $region45
    $region44: #{tpu_custom_call.1} parent=1 // pred_region
      %89 = dma.done [#allocation10], 1024
    $region45: #{tpu_custom_call.1} parent=1 // pred_fallthru
      _
    %p91 = scmp.eq.s32.totalorder 0, 0
    // Predicated region
    $region46: #{tpu_custom_call.1} parent=1 // pred_check
      %p92 = pneg %p91
    $region47: #{tpu_custom_call.1} parent=1 // pred_check_branch
      %94 = sbr.rel (%p92) target = $region49
    $region48: #{tpu_custom_call.1} parent=1 // pred_region
      %95 = vst [vmem:[#allocation2] sm:$0xff] 0.0
      %96 = vst [vmem:[#allocation2 + $0x8] sm:$0xff] 0.0
      %97 = vst [vmem:[#allocation2 + $0x10] sm:$0xff] 0.0
      %98 = vst [vmem:[#allocation2 + $0x18] sm:$0xff] 0.0
    $region49: #{tpu_custom_call.1} parent=1 // pred_fallthru
      _
    %v99 = vld [vmem:[#allocation3] sm:$0xff]
    %v100 = vunpack.c.l.s8.bf16 %v99
    %v101 = vunpack.c.h.s8.bf16 %v99
    %v102 = vld [vmem:[#allocation2] sm:$0xff]
    %v103 = vld [vmem:[#allocation2 + $0x8] sm:$0xff]
    %v104 = vld [vmem:[#allocation2 + $0x10] sm:$0xff]
    %v105 = vld [vmem:[#allocation2 + $0x18] sm:$0xff]
    %v106 = vld [vmem:[#allocation6] sm:$0xf]
    %v107 = vld [vmem:[#allocation6 + $0x4] sm:$0xf]
    %v108 = vld [vmem:[#allocation6 + $0x8] sm:$0xf]
    %v109 = vld [vmem:[#allocation6 + $0xc] sm:$0xf]
    %v110 = vld [vmem:[#allocation6 + $0x10] sm:$0xf]
    %v111 = vld [vmem:[#allocation6 + $0x14] sm:$0xf]
    %v112 = vld [vmem:[#allocation6 + $0x18] sm:$0xf]
    %v113 = vld [vmem:[#allocation6 + $0x1c] sm:$0xf]
    %v114 = vld [vmem:[#allocation6 + $0x20] sm:$0xf]
    %v115 = vld [vmem:[#allocation6 + $0x24] sm:$0xf]
    %v116 = vld [vmem:[#allocation6 + $0x28] sm:$0xf]
    %v117 = vld [vmem:[#allocation6 + $0x2c] sm:$0xf]
    %v118 = vld [vmem:[#allocation6 + $0x30] sm:$0xf]
    %v119 = vld [vmem:[#allocation6 + $0x34] sm:$0xf]
    %v120 = vld [vmem:[#allocation6 + $0x38] sm:$0xf]
    %v121 = vld [vmem:[#allocation6 + $0x3c] sm:$0xf]
    %v138 = vunpack.c.l.b16 %v106
    %v139 = vunpack.c.l.b16 %v107
    %v140 = vunpack.c.l.b16 %v108
    %v141 = vunpack.c.l.b16 %v109
    %v142 = vunpack.c.l.b16 %v110
    %v143 = vunpack.c.l.b16 %v111
    %v144 = vunpack.c.l.b16 %v112
    %v145 = vunpack.c.l.b16 %v113
    %v146 = vunpack.c.l.b16 %v114
    %v147 = vunpack.c.l.b16 %v115
    %v148 = vunpack.c.l.b16 %v116
    %v149 = vunpack.c.l.b16 %v117
    %v150 = vunpack.c.l.b16 %v118
    %v151 = vunpack.c.l.b16 %v119
    %v152 = vunpack.c.l.b16 %v120
    %v153 = vunpack.c.l.b16 %v121
    %v154 = vpack.c.b16 %v139, %v138
    %v155 = vpack.c.b16 %v141, %v140
    %v156 = vpack.c.b16 %v143, %v142
    %v157 = vpack.c.b16 %v145, %v144
    %v158 = vpack.c.b16 %v147, %v146
    %v159 = vpack.c.b16 %v149, %v148
    %v160 = vpack.c.b16 %v151, %v150
    %v161 = vpack.c.b16 %v153, %v152
    %170 = vmatprep.subr.bf16.mxu0 0
    %171 = vmatpush1.bf16.msra.mxu0 %v154
    %172 = vmatprep.subr.bf16.mxu0 0
    %173 = vmatpush1.bf16.msra.mxu0 %v155
    %174 = vmatprep.subr.bf16.mxu0 0
    %175 = vmatpush1.bf16.msra.mxu0 %v156
    %176 = vmatprep.subr.bf16.mxu0 0
    %177 = vmatpush1.bf16.msra.mxu0 %v157
    %178 = vmatprep.subr.bf16.mxu0 0
    %179 = vmatpush1.bf16.msra.mxu0 %v158
    %180 = vmatprep.subr.bf16.mxu0 0
    %181 = vmatpush1.bf16.msra.mxu0 %v159
    %182 = vmatprep.subr.bf16.mxu0 0
    %183 = vmatpush1.bf16.msra.mxu0 %v160
    %184 = vmatprep.subr.bf16.mxu0 0
    %185 = vmatpush1.bf16.msra.mxu0 %v161
    %186 = vmatprep.subr.bf16.mxu0 0
    %187 = vmatpush1.bf16.msra.mxu0 0
    %188 = vmatprep.subr.bf16.mxu0 0
    %189 = vmatpush1.bf16.msra.mxu0 0
    %190 = vmatprep.subr.bf16.mxu0 0
    %191 = vmatpush1.bf16.msra.mxu0 0
    %192 = vmatprep.subr.bf16.mxu0 0
    %193 = vmatpush1.bf16.msra.mxu0 0
    %194 = vmatprep.subr.bf16.mxu0 0
    %195 = vmatpush1.bf16.msra.mxu0 0
    %196 = vmatprep.subr.bf16.mxu0 0
    %197 = vmatpush1.bf16.msra.mxu0 0
    %198 = vmatprep.subr.bf16.mxu0 0
    %199 = vmatpush1.bf16.msra.mxu0 0
    %200 = vmatprep.subr.bf16.mxu0 0
    %201 = vmatpush1.bf16.msra.mxu0 0
    %202 = vmatprep.mubr.bf16.mxu0 0
    %203 = vmatmul.mubr.bf16.gmra.mrb[0].mxu0 %v100
    %v204 = vpop.f32.mrb[0].mxu0
    %v205 = vadd.f32 0.0, %v204
    %v206 = vpop.f32.mrb[0].mxu0
    %v207 = vpop.f32.mrb[0].mxu0
    %v208 = vadd.f32 0.0, %v207
    %v209 = vpop.f32.mrb[0].mxu0
    %210 = vmatprep.mubr.bf16.mxu0 0
    %211 = vmatmul.mubr.bf16.gmra.mrb[0].mxu0 %v101
    %v212 = vpop.f32.mrb[0].mxu0
    %v213 = vadd.f32 0.0, %v212
    %v214 = vpop.f32.mrb[0].mxu0
    %v215 = vpop.f32.mrb[0].mxu0
    %v216 = vadd.f32 0.0, %v215
    %v217 = vpop.f32.mrb[0].mxu0
    %218 = vdwg.mxu0
    %v219 = vadd.f32 %v102, %v205
    %v220 = vadd.f32 %v103, %v208
    %v221 = vadd.f32 %v104, %v213
    %v222 = vadd.f32 %v105, %v216
    %223 = vst [vmem:[#allocation2] sm:$0xff] %v219
    %224 = vst [vmem:[#allocation2 + $0x8] sm:$0xff] %v220
    %225 = vst [vmem:[#allocation2 + $0x10] sm:$0xff] %v221
    %226 = vst [vmem:[#allocation2 + $0x18] sm:$0xff] %v222
    // Predicated region
    $region50: #{tpu_custom_call.1} parent=1 // pred_check
      %p227 = pneg %p91
    $region51: #{tpu_custom_call.1} parent=1 // pred_check_branch
      %229 = sbr.rel (%p227) target = $region53
    $region52: #{tpu_custom_call.1} parent=1 // pred_region
      %v230 = vld [vmem:[#allocation2] sm:$0xff]
      %v231 = vld [vmem:[#allocation2 + $0x8] sm:$0xff]
      %v232 = vld [vmem:[#allocation2 + $0x10] sm:$0xff]
      %v233 = vld [vmem:[#allocation2 + $0x18] sm:$0xff]
      %vm234 = vcmp.gt.f32.partialorder %v230, 0.0
      %vm235 = vcmp.gt.f32.partialorder %v231, 0.0
      %vm236 = vcmp.gt.f32.partialorder %v232, 0.0
      %vm237 = vcmp.gt.f32.partialorder %v233, 0.0
      %v238 = vrcp.pop %v230
      %v239 = vrcp.pop %v231
      %v240 = vrcp.pop %v232
      %v241 = vrcp.pop %v233
      %v242 = vsel %vm234, %v238, 0.0
      %v243 = vsel %vm235, %v239, 0.0
      %v244 = vsel %vm236, %v240, 0.0
      %v245 = vsel %vm237, %v241, 0.0
      %247 = vset.pattern.permute.xlu0 32
      %248 = vperm.xlu0 %247, %v242
      %v249 = vpop.permute.xlu0 %248
      %252 = vset.pattern.permute.xlu0 32
      %253 = vperm.xlu0 %252, %v243
      %v254 = vpop.permute.xlu0 %253
      %257 = vset.pattern.permute.xlu0 32
      %258 = vperm.xlu0 %257, %v244
      %v259 = vpop.permute.xlu0 %258
      %262 = vset.pattern.permute.xlu0 32
      %263 = vperm.xlu0 %262, %v245
      %v264 = vpop.permute.xlu0 %263
      %v266 = vmul.f32 %v230, %v249
      %v267 = vmul.f32 %v231, %v254
      %v268 = vmul.f32 %v232, %v259
      %v269 = vmul.f32 %v233, %v264
      %v270 = vpack.c.bf16 %v267, %v266
      %v271 = vpack.c.bf16 %v269, %v268
      %v272 = vld [vmem:[#allocation8] sm:$0xf]
      %v273 = vld [vmem:[#allocation8 + $0x4] sm:$0xf]
      %v274 = vld [vmem:[#allocation8 + $0x8] sm:$0xf]
      %v275 = vld [vmem:[#allocation8 + $0xc] sm:$0xf]
      %v276 = vld [vmem:[#allocation9] sm:$0xf]
      %v277 = vld [vmem:[#allocation9 + $0x4] sm:$0xf]
      %v278 = vld [vmem:[#allocation9 + $0x8] sm:$0xf]
      %v279 = vld [vmem:[#allocation9 + $0xc] sm:$0xf]
      %v280 = vld [vmem:[#allocation9 + $0x10] sm:$0xf]
      %v281 = vld [vmem:[#allocation9 + $0x14] sm:$0xf]
      %v282 = vld [vmem:[#allocation9 + $0x18] sm:$0xf]
      %v283 = vld [vmem:[#allocation9 + $0x1c] sm:$0xf]
      %v284 = vld [vmem:[#allocation9 + $0x20] sm:$0xf]
      %v285 = vld [vmem:[#allocation9 + $0x24] sm:$0xf]
      %v286 = vld [vmem:[#allocation9 + $0x28] sm:$0xf]
      %v287 = vld [vmem:[#allocation9 + $0x2c] sm:$0xf]
      %v288 = vld [vmem:[#allocation9 + $0x30] sm:$0xf]
      %v289 = vld [vmem:[#allocation9 + $0x34] sm:$0xf]
      %v290 = vld [vmem:[#allocation9 + $0x38] sm:$0xf]
      %v291 = vld [vmem:[#allocation9 + $0x3c] sm:$0xf]
      %v292 = vld [vmem:[#allocation11] sm:$0xf]
      %v293 = vld [vmem:[#allocation11 + $0x4] sm:$0xf]
      %v294 = vld [vmem:[#allocation11 + $0x8] sm:$0xf]
      %v295 = vld [vmem:[#allocation11 + $0xc] sm:$0xf]
      %v296 = vld [vmem:[#allocation11 + $0x10] sm:$0xf]
      %v297 = vld [vmem:[#allocation11 + $0x14] sm:$0xf]
      %v298 = vld [vmem:[#allocation11 + $0x18] sm:$0xf]
      %v299 = vld [vmem:[#allocation11 + $0x1c] sm:$0xf]
      %v300 = vld [vmem:[#allocation11 + $0x20] sm:$0xf]
      %v301 = vld [vmem:[#allocation11 + $0x24] sm:$0xf]
      %v302 = vld [vmem:[#allocation11 + $0x28] sm:$0xf]
      %v303 = vld [vmem:[#allocation11 + $0x2c] sm:$0xf]
      %v304 = vld [vmem:[#allocation11 + $0x30] sm:$0xf]
      %v305 = vld [vmem:[#allocation11 + $0x34] sm:$0xf]
      %v306 = vld [vmem:[#allocation11 + $0x38] sm:$0xf]
      %v307 = vld [vmem:[#allocation11 + $0x3c] sm:$0xf]
      %v324 = vunpack.c.l.b16 %v292
      %v325 = vunpack.c.l.b16 %v293
      %v326 = vunpack.c.l.b16 %v294
      %v327 = vunpack.c.l.b16 %v295
      %v328 = vunpack.c.l.b16 %v296
      %v329 = vunpack.c.l.b16 %v297
      %v330 = vunpack.c.l.b16 %v298
      %v331 = vunpack.c.l.b16 %v299
      %v332 = vunpack.c.l.b16 %v300
      %v333 = vunpack.c.l.b16 %v301
      %v334 = vunpack.c.l.b16 %v302
      %v335 = vunpack.c.l.b16 %v303
      %v336 = vunpack.c.l.b16 %v304
      %v337 = vunpack.c.l.b16 %v305
      %v338 = vunpack.c.l.b16 %v306
      %v339 = vunpack.c.l.b16 %v307
      %v340 = vpack.c.b16 %v325, %v324
      %v341 = vpack.c.b16 %v327, %v326
      %v342 = vpack.c.b16 %v329, %v328
      %v343 = vpack.c.b16 %v331, %v330
      %v344 = vpack.c.b16 %v333, %v332
      %v345 = vpack.c.b16 %v335, %v334
      %v346 = vpack.c.b16 %v337, %v336
      %v347 = vpack.c.b16 %v339, %v338
      %356 = vmatprep.subr.bf16.mxu0 0
      %357 = vmatpush1.bf16.msra.mxu0 %v340
      %358 = vmatprep.subr.bf16.mxu0 0
      %359 = vmatpush1.bf16.msra.mxu0 %v341
      %360 = vmatprep.subr.bf16.mxu0 0
      %361 = vmatpush1.bf16.msra.mxu0 %v342
      %362 = vmatprep.subr.bf16.mxu0 0
      %363 = vmatpush1.bf16.msra.mxu0 %v343
      %364 = vmatprep.subr.bf16.mxu0 0
      %365 = vmatpush1.bf16.msra.mxu0 %v344
      %366 = vmatprep.subr.bf16.mxu0 0
      %367 = vmatpush1.bf16.msra.mxu0 %v345
      %368 = vmatprep.subr.bf16.mxu0 0
      %369 = vmatpush1.bf16.msra.mxu0 %v346
      %370 = vmatprep.subr.bf16.mxu0 0
      %371 = vmatpush1.bf16.msra.mxu0 %v347
      %372 = vmatprep.subr.bf16.mxu0 0
      %373 = vmatpush1.bf16.msra.mxu0 0
      %374 = vmatprep.subr.bf16.mxu0 0
      %375 = vmatpush1.bf16.msra.mxu0 0
      %376 = vmatprep.subr.bf16.mxu0 0
      %377 = vmatpush1.bf16.msra.mxu0 0
      %378 = vmatprep.subr.bf16.mxu0 0
      %379 = vmatpush1.bf16.msra.mxu0 0
      %380 = vmatprep.subr.bf16.mxu0 0
      %381 = vmatpush1.bf16.msra.mxu0 0
      %382 = vmatprep.subr.bf16.mxu0 0
      %383 = vmatpush1.bf16.msra.mxu0 0
      %384 = vmatprep.subr.bf16.mxu0 0
      %385 = vmatpush1.bf16.msra.mxu0 0
      %386 = vmatprep.subr.bf16.mxu0 0
      %387 = vmatpush1.bf16.msra.mxu0 0
      %388 = vmatprep.mubr.bf16.mxu0 0
      %389 = vmatmul.mubr.bf16.gmra.mrb[0].mxu0 %v270
      %v390 = vpop.f32.mrb[0].mxu0
      %v391 = vadd.f32 0.0, %v390
      %v392 = vpop.f32.mrb[0].mxu0
      %v393 = vpop.f32.mrb[0].mxu0
      %v394 = vadd.f32 0.0, %v393
      %v395 = vpop.f32.mrb[0].mxu0
      %396 = vmatprep.mubr.bf16.mxu0 0
      %397 = vmatmul.mubr.bf16.gmra.mrb[0].mxu0 %v271
      %v398 = vpop.f32.mrb[0].mxu0
      %v399 = vadd.f32 0.0, %v398
      %v400 = vpop.f32.mrb[0].mxu0
      %v401 = vpop.f32.mrb[0].mxu0
      %v402 = vadd.f32 0.0, %v401
      %v403 = vpop.f32.mrb[0].mxu0
      %404 = vdwg.mxu0
      %v409 = vunpack.c.l.b16 %v272
      %v410 = vunpack.c.l.b16 %v273
      %v411 = vunpack.c.l.b16 %v274
      %v412 = vunpack.c.l.b16 %v275
      %v413 = vpack.c.b16 %v410, %v409
      %v414 = vpack.c.b16 %v412, %v411
      %v433 = vunpack.c.l.b16 %v276
      %v434 = vunpack.c.l.b16 %v277
      %v435 = vunpack.c.l.b16 %v278
      %v436 = vunpack.c.l.b16 %v279
      %v437 = vunpack.c.l.b16 %v280
      %v438 = vunpack.c.l.b16 %v281
      %v439 = vunpack.c.l.b16 %v282
      %v440 = vunpack.c.l.b16 %v283
      %v441 = vunpack.c.l.b16 %v284
      %v442 = vunpack.c.l.b16 %v285
      %v443 = vunpack.c.l.b16 %v286
      %v444 = vunpack.c.l.b16 %v287
      %v445 = vunpack.c.l.b16 %v288
      %v446 = vunpack.c.l.b16 %v289
      %v447 = vunpack.c.l.b16 %v290
      %v448 = vunpack.c.l.b16 %v291
      %v449 = vpack.c.b16 %v434, %v433
      %v450 = vpack.c.b16 %v436, %v435
      %v451 = vpack.c.b16 %v438, %v437
      %v452 = vpack.c.b16 %v440, %v439
      %v453 = vpack.c.b16 %v442, %v441
      %v454 = vpack.c.b16 %v444, %v443
      %v455 = vpack.c.b16 %v446, %v445
      %v456 = vpack.c.b16 %v448, %v447
      %465 = vmatprep.subr.bf16.mxu0 0
      %466 = vmatpush1.bf16.msra.mxu0 %v449
      %467 = vmatprep.subr.bf16.mxu0 0
      %468 = vmatpush1.bf16.msra.mxu0 %v450
      %469 = vmatprep.subr.bf16.mxu0 0
      %470 = vmatpush1.bf16.msra.mxu0 %v451
      %471 = vmatprep.subr.bf16.mxu0 0
      %472 = vmatpush1.bf16.msra.mxu0 %v452
      %473 = vmatprep.subr.bf16.mxu0 0
      %474 = vmatpush1.bf16.msra.mxu0 %v453
      %475 = vmatprep.subr.bf16.mxu0 0
      %476 = vmatpush1.bf16.msra.mxu0 %v454
      %477 = vmatprep.subr.bf16.mxu0 0
      %478 = vmatpush1.bf16.msra.mxu0 %v455
      %479 = vmatprep.subr.bf16.mxu0 0
      %480 = vmatpush1.bf16.msra.mxu0 %v456
      %481 = vmatprep.subr.bf16.mxu0 0
      %482 = vmatpush1.bf16.msra.mxu0 0
      %483 = vmatprep.subr.bf16.mxu0 0
      %484 = vmatpush1.bf16.msra.mxu0 0
      %485 = vmatprep.subr.bf16.mxu0 0
      %486 = vmatpush1.bf16.msra.mxu0 0
      %487 = vmatprep.subr.bf16.mxu0 0
      %488 = vmatpush1.bf16.msra.mxu0 0
      %489 = vmatprep.subr.bf16.mxu0 0
      %490 = vmatpush1.bf16.msra.mxu0 0
      %491 = vmatprep.subr.bf16.mxu0 0
      %492 = vmatpush1.bf16.msra.mxu0 0
      %493 = vmatprep.subr.bf16.mxu0 0
      %494 = vmatpush1.bf16.msra.mxu0 0
      %495 = vmatprep.subr.bf16.mxu0 0
      %496 = vmatpush1.bf16.msra.mxu0 0
      %497 = vmatprep.mubr.bf16.mxu0 0
      %498 = vmatmul.mubr.bf16.gmra.mrb[0].mxu0 %v413
      %v499 = vpop.f32.mrb[0].mxu0
      %v500 = vadd.f32 %v391, %v499
      %v501 = vpop.f32.mrb[0].mxu0
      %v502 = vpop.f32.mrb[0].mxu0
      %v503 = vadd.f32 %v394, %v502
      %v504 = vpop.f32.mrb[0].mxu0
      %505 = vmatprep.mubr.bf16.mxu0 0
      %506 = vmatmul.mubr.bf16.gmra.mrb[0].mxu0 %v414
      %v507 = vpop.f32.mrb[0].mxu0
      %v508 = vadd.f32 %v399, %v507
      %v509 = vpop.f32.mrb[0].mxu0
      %v510 = vpop.f32.mrb[0].mxu0
      %v511 = vadd.f32 %v402, %v510
      %v512 = vpop.f32.mrb[0].mxu0
      %513 = vdwg.mxu0
      %v514 = vld [vmem:[%s5] sm:$0x1]
      %v516 = vlaneseq
      %v517 = vshrl.u32 %v516, 7
      %v518 = vsub.s32 0, %v517
      %v519 = vrot.slane %v514, %v518
      %v521 = vadd.f32 %v500, %v519
      %v522 = vadd.f32 %v503, %v519
      %v523 = vadd.f32 %v508, %v519
      %v524 = vadd.f32 %v511, %v519
      %v525 = vmax.f32 %v521, 0.0
      %v526 = vmax.f32 %v522, 0.0
      %v527 = vmax.f32 %v523, 0.0
      %v528 = vmax.f32 %v524, 0.0
      %529 = vst [vmem:[#allocation12] sm:$0xff] %v525
      %530 = vst [vmem:[#allocation12 + $0x8] sm:$0xff] %v526
      %531 = vst [vmem:[#allocation12 + $0x10] sm:$0xff] %v527
      %532 = vst [vmem:[#allocation12 + $0x18] sm:$0xff] %v528
    $region53: #{tpu_custom_call.1} parent=1 // pred_fallthru
      _
    // Predicated region
    $region54: #{tpu_custom_call.1} parent=1 // pred_check
      _
    $region55: #{tpu_custom_call.1} parent=1 // pred_check_branch
      %534 = sbr.rel (0) target = $region57
    $region56: #{tpu_custom_call.1} parent=1 // pred_region
      %s536 = ssub.s32 512, 512
      %537 = vsyncadd [#allocation5], %s536
      %s538 = sshll.u32 [#allocation12], 4
      %s539 = int_to_ptr.vmem [resolvable:$true] %s538
      %544 = dma.vmem_to_hbm [thread:$0]  %s539, 512, %s6, [#allocation5], 128, 128, 8
    $region57: #{tpu_custom_call.1} parent=1 // pred_fallthru
      _
    // Predicated region
    $region58: #{tpu_custom_call.1} parent=1 // pred_check
      _
    $region59: #{tpu_custom_call.1} parent=1 // pred_check_branch
      %546 = sbr.rel (0) target = $region61
    $region60: #{tpu_custom_call.1} parent=1 // pred_region
      %547 = dma.done [#allocation5], 512
    $region61: #{tpu_custom_call.1} parent=1 // pred_fallthru
      _
    %548 = vsyncpa [#allocation4], 1
    %549 = vsyncpa [#allocation7], 1
    %550 = vsyncpa [#allocation10], 1
    %551 = vsyncpa [#allocation5], 1

</llo_original>
